<compile_context>
chip_gen: v7x
topology: tpu7x:2x2x1
jax: 0.10.0
libtpu: 0.0.40
codegen_flags: <defaults>
</compile_context>

<pallas_src>
import math

import jax
import jax.numpy as jnp
from jax import lax
from jax.experimental import pallas as pl
from jax.experimental.pallas import tpu as pltpu

QUANT_BLOCK = 128  # DeepSeek-V3 quantization block (128 x 128)


# ----------------------------------------------------------------------------
# Hardware-aware defaults (generation detection is best-effort with fallbacks).
# ----------------------------------------------------------------------------
def _device_kind():
    try:
        return jax.devices()[0].device_kind.lower()
    except Exception:
        return ""


def _vmem_capacity_bytes():
    try:
        return int(pltpu.get_tpu_info().vmem_capacity_bytes)
    except Exception:
        return (64 if "v7" in _device_kind() else 128) * 1024 * 1024


def _vmem_limit_bytes():
    # <=96 MiB on 128 MiB chips (v5e/v6e); ~51 MiB on v7x's 64 MiB/TC.
    return int(min(96 * 1024 * 1024, 0.8 * _vmem_capacity_bytes()))


def _is_v5e():
    k = _device_kind()
    return ("v5 lite" in k) or ("v5e" in k) or ("v5litepod" in k)


def _weight_spec(block_shape, index_map, buffers):
    """Weight BlockSpec with optional deeper pipelining (v5e DMA hiding)."""
    if buffers and buffers > 2:
        try:
            return pl.BlockSpec(block_shape, index_map,
                                pipeline_mode=pl.Buffered(buffers))
        except TypeError:  # jax without pipeline_mode support
            pass
    return pl.BlockSpec(block_shape, index_map)


# ----------------------------------------------------------------------------
# In-kernel per-128-row-block dequantization of a weight tile.
# ----------------------------------------------------------------------------
def _dequant_tile_bf16(w, s):
    """w: (R, C) quantized tile; s: (R//128, C) column-expanded scales.
    bf16 math: fp8 e4m3 -> bf16 is exact, only the scale rounds; keeps the
    temporaries bf16 (half the VMEM/vreg pressure of f32, bf16 VPU on v6e/v7x).
    Row-split reshape stays inside (8,128) tiles -> no relayout copy."""
    rows, cols = w.shape
    nb = s.shape[0]
    wb = w.astype(jnp.bfloat16).reshape(nb, rows // nb, cols)
    return (wb * s.astype(jnp.bfloat16)[:, None, :]).reshape(rows, cols)


def _dequant_tile_f32(w, s):
    """f32 multiply then cast -- bit-identical to the PyTorch reference
    (used by the standalone weight-install dequant kernel only)."""
    rows, cols = w.shape
    nb = s.shape[0]
    wf = w.astype(jnp.float32).reshape(nb, rows // nb, cols) * s[:, None, :]
    return wf.reshape(rows, cols).astype(jnp.bfloat16)


# ----------------------------------------------------------------------------
# Standalone DeepSeek-V3 block dequantization (module's weight-install path).
# ----------------------------------------------------------------------------
def _dequant_kernel(w_ref, s_ref, o_ref):
    # w_ref: (rb*128, cols) quantized block-rows; s_ref: (1, rb, cols) scales.
    o_ref[...] = _dequant_tile_f32(w_ref[...], s_ref[0])


def deepseek_v3_dequantization(weight_data_fp8, weight_scale_inv_fp32,
                               block_size=(128, 128)):
    """bf16 = fp8 * per-(128x128)-block scale_inv, as one streaming pass.

    HBM-bound: each grid step handles several full-width 128-row block-rows
    (lane-dense stores); the tile size is the largest whose working set
    (~10 B/elem: 2x fp8 in, 2x bf16 out, f32 temp) fits in half the scoped
    VMEM budget, which lands on the 256-1024-row tiles that sit near the HBM
    roofline on all generations."""
    rows, cols = weight_data_fp8.shape
    nbr = math.ceil(rows / block_size[0])
    nbc = math.ceil(cols / block_size[1])
    assert weight_scale_inv_fp32.shape == (nbr, nbc)

    # Tiny prep (install path, runs once per weight load): expand scales along
    # the column (lane) axis only -> (nbr, cols) f32 ~= weight_bytes / 32.
    s_cols = jnp.repeat(weight_scale_inv_fp32.astype(jnp.float32),
                        block_size[1], axis=1)[:, :cols]

    budget = _vmem_limit_bytes() // 2
    rb = next((c for c in (16, 8, 4, 2, 1)
               if nbr % c == 0 and c * block_size[0] * cols * 10 <= budget), 1)

    return pl.pallas_call(
        _dequant_kernel,
        out_shape=jax.ShapeDtypeStruct((rows, cols), jnp.bfloat16),
        grid=(nbr // rb,),
        in_specs=[
            pl.BlockSpec((rb * block_size[0], cols), lambda i: (i, 0)),
            pl.BlockSpec((1, rb, cols), lambda i: (i, 0, 0)),
        ],
        out_specs=pl.BlockSpec((rb * block_size[0], cols), lambda i: (i, 0)),
        compiler_params=pltpu.CompilerParams(
            dimension_semantics=("parallel",),
            vmem_limit_bytes=_vmem_limit_bytes()),
    )(weight_data_fp8, s_cols.reshape(nbr // rb, rb, cols))


# ----------------------------------------------------------------------------
# Install-time scale packing for the fused expert kernel (hoists the only
# on-device prep out of the forward path; ~weight_bytes/64).
# ----------------------------------------------------------------------------
def prepare_expert_scales(scale_inv, cols, block=QUANT_BLOCK):
    """(n_block_rows, n_block_cols) f32 -> (n_block_rows, cols) bf16,
    column-expanded only (the per-128-row broadcast happens in-kernel)."""
    return jnp.repeat(scale_inv.astype(jnp.float32), block,
                      axis=1)[:, :cols].astype(jnp.bfloat16)


# ----------------------------------------------------------------------------
# Fused expert MLP kernels: one (token-tile, inter-tile) grid step.
# ----------------------------------------------------------------------------
def _expert_kernel_quant(x_ref, w1_ref, s1_ref, w3_ref, s3_ref, w2_ref, s2_ref,
                         o_ref, acc_ref):
    """
    x_ref  : (tm, H) bf16        activation tile (resident across inter-tiles)
    w1_ref : (ti, H)             gate_proj rows for inter-tile k (quantized)
    s1_ref : (1, ti//128, H)     their column-expanded bf16 scales
    w3_ref : (ti, H), s3_ref     up_proj rows + scales
    w2_ref : (H, ti), s2_ref(H//128, ti)  down_proj columns + scales
    o_ref  : (tm, H)             output tile (written on the last inter-tile)
    acc_ref: (tm, H) f32         VMEM accumulator
    """
    k = pl.program_id(1)

    @pl.when(k == 0)
    def _init():
        acc_ref[...] = jnp.zeros_like(acc_ref)

    x = x_ref[...]  # already bf16 (cast once, outside the kernel)

    # Gate / up projections: two N=ti MXU passes; W1/W3 streamed straight from
    # HBM (no per-call repacking).  NT matmuls (contraction on both last axes)
    # are MXU-native, so no XLU transpose of the weight tile is generated.
    w1 = _dequant_tile_bf16(w1_ref[...], s1_ref[0])
    gate = lax.dot_general(x, w1, (((1,), (1,)), ((), ())),
                           preferred_element_type=jnp.float32)
    w3 = _dequant_tile_bf16(w3_ref[...], s3_ref[0])
    up = lax.dot_general(x, w3, (((1,), (1,)), ((), ())),
                         preferred_element_type=jnp.float32)
    h = (gate * jax.nn.sigmoid(gate) * up).astype(jnp.bfloat16)  # SiLU(g)*u

    # Partial down-projection for this inter-tile, accumulated in f32:
    #   acc += h @ W2[:, k_tile].T
    w2 = _dequant_tile_bf16(w2_ref[...], s2_ref[...])
    acc_ref[...] += lax.dot_general(h, w2, (((1,), (1,)), ((), ())),
                                    preferred_element_type=jnp.float32)

    @pl.when(k == pl.num_programs(1) - 1)
    def _finalize():
        o_ref[...] = acc_ref[...].astype(o_ref.dtype)


def _expert_kernel_plain(x_ref, w1_ref, w3_ref, w2_ref, o_ref, acc_ref):
    """Specialized unquantized path: no scale tables streamed, no dequant."""
    k = pl.program_id(1)

    @pl.when(k == 0)
    def _init():
        acc_ref[...] = jnp.zeros_like(acc_ref)

    x = x_ref[...]
    gate = lax.dot_general(x, w1_ref[...].astype(jnp.bfloat16),
                           (((1,), (1,)), ((), ())),
                           preferred_element_type=jnp.float32)
    up = lax.dot_general(x, w3_ref[...].astype(jnp.bfloat16),
                         (((1,), (1,)), ((), ())),
                         preferred_element_type=jnp.float32)
    h = (gate * jax.nn.sigmoid(gate) * up).astype(jnp.bfloat16)
    acc_ref[...] += lax.dot_general(h, w2_ref[...].astype(jnp.bfloat16),
                                    (((1,), (1,)), ((), ())),
                                    preferred_element_type=jnp.float32)

    @pl.when(k == pl.num_programs(1) - 1)
    def _finalize():
        o_ref[...] = acc_ref[...].astype(o_ref.dtype)


def expert_wrapper_forward(hidden_states, w1, w2, w3,
                           w1_scale_inv=None, w2_scale_inv=None,
                           w3_scale_inv=None, *,
                           token_num_upper_bound=None, tm=None, ti=None):
    """result[i] = Expert(hidden_states[i]) for every token.

    Weights stay in their native nn.Linear [out, in] layout (no transposes).
    They may be DeepSeek-V3 fp8 with per-128x128 scale_inv tables (dequant is
    fused into the kernel; scales may be raw (nbr,nbc) or pre-expanded via
    prepare_expert_scales) or plain bf16/f32 (dequant-free kernel variant).

    token_num_upper_bound is accepted for interface parity; in the PyTorch
    wrapper it only bounds peak activation memory, which the Pallas grid
    already provides, so the token tile `tm` is chosen for MXU efficiency.
    """
    del token_num_upper_bound
    n_tokens, hidden = hidden_states.shape
    inter = w1.shape[0]
    assert w1.shape == (inter, hidden)
    assert w3.shape == (inter, hidden)
    assert w2.shape == (hidden, inter)
    assert hidden % QUANT_BLOCK == 0, "hidden dim must be a multiple of 128"

    # Generation-aware defaults: fill the MXU M dimension (256 on v6e/v7x,
    # 128 on v5e's 4x128x128 MXU); ti=256 keeps per-step fp8 weight DMA ~<2 MB.
    is_v5e = _is_v5e()
    if tm is None:
        tm = 128 if is_v5e else 256
    if ti is None:
        ti = 256
    assert ti % QUANT_BLOCK == 0 and inter % ti == 0, \
        "inter tile must be a multiple of 128 and divide the intermediate dim"

    nbh = hidden // QUANT_BLOCK
    nbi = inter // QUANT_BLOCK
    nti = inter // ti
    r = ti // QUANT_BLOCK

    quantized = not (w1_scale_inv is None and w2_scale_inv is None
                     and w3_scale_inv is None)

    # Cast activations to bf16 once (not nti times inside the kernel body).
    out_dtype = hidden_states.dtype
    x = (hidden_states if hidden_states.dtype == jnp.bfloat16
         else hidden_states.astype(jnp.bfloat16))

    # Token tile: multiple of 16 (bf16 sublane packing); ragged last tile is
    # handled by the grid's masked edge block (padding rows never reach out).
    tm = max(16, min(tm, ((n_tokens + 15) // 16) * 16))
    grid = (pl.cdiv(n_tokens, tm), nti)

    wbuf = 3 if is_v5e else 0  # deeper weight pipelining hides DMA on v5e
    x_spec = pl.BlockSpec((tm, hidden), lambda t, k: (t, 0))
    o_spec = pl.BlockSpec((tm, hidden), lambda t, k: (t, 0))
    w1_spec = _weight_spec((ti, hidden), lambda t, k: (k, 0), wbuf)
    w3_spec = _weight_spec((ti, hidden), lambda t, k: (k, 0), wbuf)
    w2_spec = _weight_spec((hidden, ti), lambda t, k: (0, k), wbuf)

    compiler_params = pltpu.CompilerParams(
        dimension_semantics=("parallel", "arbitrary"),  # megacore over tokens
        vmem_limit_bytes=_vmem_limit_bytes())
    scratch = [pltpu.VMEM((tm, hidden), jnp.float32)]
    out_shape = jax.ShapeDtypeStruct((n_tokens, hidden), out_dtype)

    if not quantized:
        return pl.pallas_call(
            _expert_kernel_plain,
            out_shape=out_shape, grid=grid,
            in_specs=[x_spec, w1_spec, w3_spec, w2_spec],
            out_specs=o_spec, scratch_shapes=scratch,
            compiler_params=compiler_params,
        )(x, w1, w3, w2)

    # Quantized path. Scale tables are tiny (weight_bytes/64 as bf16); accept
    # pre-expanded tables from the install path so the forward does no
    # on-device repacking at all (the (nbr,cols)->(nti,r,cols) reshape is a
    # free bitcast).
    def _expanded(s, nbr, cols):
        assert s is not None, "w1/w2/w3 scale_inv must all be given together"
        if s.shape == (nbr, math.ceil(cols / QUANT_BLOCK)):
            return prepare_expert_scales(s, cols)
        assert s.shape == (nbr, cols), f"unexpected scale shape {s.shape}"
        return s.astype(jnp.bfloat16)

    s1 = _expanded(w1_scale_inv, nbi, hidden).reshape(nti, r, hidden)
    s3 = _expanded(w3_scale_inv, nbi, hidden).reshape(nti, r, hidden)
    s2 = _expanded(w2_scale_inv, nbh, inter)

    s1_spec = pl.BlockSpec((1, r, hidden), lambda t, k: (k, 0, 0))
    s3_spec = pl.BlockSpec((1, r, hidden), lambda t, k: (k, 0, 0))
    s2_spec = pl.BlockSpec((nbh, ti), lambda t, k: (0, k))

    return pl.pallas_call(
        _expert_kernel_quant,
        out_shape=out_shape, grid=grid,
        in_specs=[x_spec, w1_spec, s1_spec, w3_spec, s3_spec, w2_spec, s2_spec],
        out_specs=o_spec, scratch_shapes=scratch,
        compiler_params=compiler_params,
    )(x, w1, s1, w3, s3, w2, s2)


# ----------------------------------------------------------------------------
# Pure-JAX references for validation.
# ----------------------------------------------------------------------------
def _dequant_reference(w, scale_inv, block=QUANT_BLOCK):
    rows, cols = w.shape
    e = jnp.repeat(jnp.repeat(scale_inv.astype(jnp.float32), block, axis=0),
                   block, axis=1)[:rows, :cols]
    return (w.astype(jnp.float32) * e).astype(jnp.bfloat16)


def _expert_reference(x, w1_bf16, w2_bf16, w3_bf16):
    xf = x.astype(jnp.float32)
    g = xf @ w1_bf16.astype(jnp.float32).T
    u = xf @ w3_bf16.astype(jnp.float32).T
    h = (g * jax.nn.sigmoid(g) * u).astype(jnp.bfloat16).astype(jnp.float32)
    y = h @ w2_bf16.astype(jnp.float32).T
    return y.astype(x.dtype)


def _assert_close(got, want, atol, rtol, name):
    got = got.astype(jnp.float32)
    want = want.astype(jnp.float32)
    excess = jnp.max(jnp.abs(got - want) - (atol + rtol * jnp.abs(want)))
    assert float(excess) <= 0.0, f"{name}: tolerance exceeded by {float(excess)}"


if __name__ == "__main__":
    key = jax.random.PRNGKey(0)
    k_x, k1, k2, k3 = jax.random.split(key, 4)

    N_TOKENS = 320      # not a multiple of the token tile -> ragged last tile
    HIDDEN = 256        # model hidden size   (2 quant blocks)
    INTER = 512         # expert intermediate (4 quant blocks, 2 inter tiles)
    TOKEN_UPPER_BOUND = 96  # wrapper micro-batch bound (memory bound only)

    hidden_states = (0.5 * jax.random.normal(
        k_x, (N_TOKENS, HIDDEN), jnp.float32)).astype(jnp.bfloat16)

    # "Checkpoint" weights, DeepSeek-V3 style: fp8 data + per-128x128 inverse
    # scales (non-uniform, so block indexing is actually exercised).
    def make_quantized(k, shape):
        kw, ks = jax.random.split(k)
        w = 0.1 * jax.random.normal(kw, shape, jnp.float32)
        nbr = math.ceil(shape[0] / QUANT_BLOCK)
        nbc = math.ceil(shape[1] / QUANT_BLOCK)
        scale_inv = 0.05 + 0.45 * jax.random.uniform(ks, (nbr, nbc), jnp.float32)
        expanded = jnp.repeat(jnp.repeat(scale_inv, QUANT_BLOCK, axis=0),
                              QUANT_BLOCK, axis=1)[:shape[0], :shape[1]]
        w_fp8 = (w / expanded).astype(jnp.float8_e4m3fn)
        return w_fp8, scale_inv

    w1_fp8, w1_s = make_quantized(k1, (INTER, HIDDEN))   # gate_proj
    w2_fp8, w2_s = make_quantized(k2, (HIDDEN, INTER))   # down_proj
    w3_fp8, w3_s = make_quantized(k3, (INTER, HIDDEN))   # up_proj

    # --- standalone dequantization kernel (module's get_weights path) -------
    w1_dq = jax.block_until_ready(deepseek_v3_dequantization(w1_fp8, w1_s))
    w2_dq = deepseek_v3_dequantization(w2_fp8, w2_s)
    w3_dq = deepseek_v3_dequantization(w3_fp8, w3_s)
    _assert_close(w1_dq, _dequant_reference(w1_fp8, w1_s), 1e-6, 1e-6, "dequant")

    ref = _expert_reference(hidden_states,
                            _dequant_reference(w1_fp8, w1_s),
                            _dequant_reference(w2_fp8, w2_s),
                            _dequant_reference(w3_fp8, w3_s))

    # --- fused fp8 expert forward, raw scale tables --------------------------
    out_fp8 = expert_wrapper_forward(
        hidden_states, w1_fp8, w2_fp8, w3_fp8,
        w1_scale_inv=w1_s, w2_scale_inv=w2_s, w3_scale_inv=w3_s,
        token_num_upper_bound=TOKEN_UPPER_BOUND)
    out_fp8 = jax.block_until_ready(out_fp8)
    assert out_fp8.shape == hidden_states.shape
    assert out_fp8.dtype == hidden_states.dtype
    _assert_close(out_fp8, ref, 3e-2, 3e-2, "fused fp8 expert forward")

    # --- fused fp8 expert forward, install-time packed scales ----------------
    s1_packed = prepare_expert_scales(w1_s, HIDDEN)
    s2_packed = prepare_expert_scales(w2_s, INTER)
    s3_packed = prepare_expert_scales(w3_s, HIDDEN)
    out_fp8_p = expert_wrapper_forward(
        hidden_states, w1_fp8, w2_fp8, w3_fp8,
        w1_scale_inv=s1_packed, w2_scale_inv=s2_packed, w3_scale_inv=s3_packed,
        token_num_upper_bound=TOKEN_UPPER_BOUND)
    out_fp8_p = jax.block_until_ready(out_fp8_p)
    _assert_close(out_fp8_p, ref, 3e-2, 3e-2, "fused fp8 expert (packed scales)")

    # --- non-quantized branch (weights installed as plain bf16) -------------
    out_bf16 = expert_wrapper_forward(
        hidden_states, w1_dq, w2_dq, w3_dq,
        token_num_upper_bound=TOKEN_UPPER_BOUND)
    out_bf16 = jax.block_until_ready(out_bf16)
    _assert_close(out_bf16, ref, 3e-2, 3e-2, "bf16 expert forward")

    print("KERNEL_OK")
</pallas_src>

<mosaic_0001>
module attributes {stable_mosaic.version = 11 : i64} {
  func.func @_dequant_kernel(%arg0: i32, %arg1: memref<512x256xf8E4M3FN, #tpu.memory_space<vmem>>, %arg2: memref<1x4x256xf32, #tpu.memory_space<vmem>>, %arg3: memref<512x256xbf16, #tpu.memory_space<vmem>>) attributes {dimension_semantics = [#tpu.dimension_semantics<parallel>], iteration_bounds = array<i64: 1>, scalar_prefetch = 0 : i64, scratch_operands = 0 : i64, tpu.core_type = #tpu.core_type<tc>, window_params = [{transform_indices = @transform_0, window_bounds = array<i64: 512, 256>}, {transform_indices = @transform_1, window_bounds = array<i64: 1, 4, 256>}, {transform_indices = @transform_2, window_bounds = array<i64: 512, 256>}]} {
    %c0 = arith.constant 0 : index
    %c0_0 = arith.constant 0 : index
    %0 = vector.load %arg1[%c0, %c0_0] : memref<512x256xf8E4M3FN, #tpu.memory_space<vmem>>, vector<512x256xf8E4M3FN>
    %c0_1 = arith.constant 0 : index
    %c0_2 = arith.constant 0 : index
    %c0_3 = arith.constant 0 : index
    %1 = vector.load %arg2[%c0_1, %c0_2, %c0_3] : memref<1x4x256xf32, #tpu.memory_space<vmem>>, vector<1x4x256xf32>
    %2 = vector.shape_cast %1 : vector<1x4x256xf32> to vector<4x256xf32>
    %3 = arith.extf %0 : vector<512x256xf8E4M3FN> to vector<512x256xf32>
    %4 = vector.shape_cast %3 : vector<512x256xf32> to vector<4x128x256xf32>
    %5 = vector.shape_cast %2 : vector<4x256xf32> to vector<4x1x256xf32>
    %6 = vector.broadcast %5 : vector<4x1x256xf32> to vector<4x128x256xf32>
    %7 = arith.mulf %4, %6 : vector<4x128x256xf32>
    %8 = vector.shape_cast %7 : vector<4x128x256xf32> to vector<512x256xf32>
    %9 = arith.truncf %8 : vector<512x256xf32> to vector<512x256xbf16>
    %c0_4 = arith.constant 0 : index
    %c0_5 = arith.constant 0 : index
    %10 = vector.load %arg3[%c0_4, %c0_5] : memref<512x256xbf16, #tpu.memory_space<vmem>>, vector<512x256xbf16>
    tpu.vector_store %arg3[%c0_4, %c0_5], %9 {strides = array<i32>} : memref<512x256xbf16, #tpu.memory_space<vmem>>, vector<512x256xbf16>,
    return
  }
  func.func @transform_0(%arg0: i32) -> (i32, i32) {
    %c0_i32 = arith.constant 0 : i32
    %c0_i32_0 = arith.constant 0 : i32
    return %arg0, %c0_i32 : i32, i32
  }
  func.func @transform_1(%arg0: i32) -> (i32, i32, i32) {
    %c0_i32 = arith.constant 0 : i32
    %c0_i32_0 = arith.constant 0 : i32
    %c0_i32_1 = arith.constant 0 : i32
    return %arg0, %c0_i32, %c0_i32_0 : i32, i32, i32
  }
  func.func @transform_2(%arg0: i32) -> (i32, i32) {
    %c0_i32 = arith.constant 0 : i32
    %c0_i32_0 = arith.constant 0 : i32
    return %arg0, %c0_i32 : i32, i32
  }
}

</mosaic_0001>

<llo_original>
// kernel: tpu_custom_call.1
$region0: #{tpu_custom_call.1}
  #allocation0 [shape = 'u32[]', space=smem, size = 0x4, offset = 0x4, fixed_abs, tag = 'smem constant byte address 0x4 - core index']
  #allocation1 [shape = 'u32[144,128]{1,0:T(1,128)}', space=vmem, size = 0x12000, scoped, tag = 'internal scratch']
  %s0 = inlined_call_operand.hbm [shape: f8e4m3fn[512,256], index: 0, kind: input, shape index: {}]
  %s1 = inlined_call_operand.hbm [shape: f32[1,4,256], index: 1, kind: input, shape index: {}]
  %s2 = inlined_call_operand.hbm [shape: bf16[512,256], index: 2, kind: output, shape index: {}]
  %s3 = sld [smem:[#allocation0]]
  $region26: #{tpu_custom_call.1} parent=0
    _
  %s5 = ssub.s32 1, %s3
  %s6 = scalar_select 0, %s5, %s3
  $region1: #{tpu_custom_call.1} parent=0
    #allocation2 [shape = 'u8[131072]{0}', space=vmem, size = 0x20000, scoped, tag = 'input window, operand 0, single buffered']
    #allocation3 [shape = 's32[1]{0}', space=sflag, size = 0x4, scoped, tag = 'scoped memory for tpu_custom_call.1']
    #allocation4 [shape = 's32[1]{0}', space=sflag, size = 0x4, scoped, tag = 'scoped memory for tpu_custom_call.1']
    #allocation5 [shape = 'u8[4096]{0}', space=vmem, size = 0x1000, scoped, tag = 'input window, operand 1, single buffered']
    #allocation6 [shape = 's32[1]{0}', space=sflag, size = 0x4, scoped, tag = 'scoped memory for tpu_custom_call.1']
    #allocation7 [shape = 'u8[262144]{0}', space=vmem, size = 0x40000, scoped, tag = 'output window, operand 0, single buffered']
    %7 = vsyncpa [#allocation3], 0
    %8 = vsyncpa [#allocation6], 0
    %9 = vsyncpa [#allocation4], 0
    // Predicated region
    $region2: #{tpu_custom_call.1} parent=1 // pred_check
      _
    $region3: #{tpu_custom_call.1} parent=1 // pred_check_branch
      %11 = sbr.rel (0) target = $region5
    $region4: #{tpu_custom_call.1} parent=1 // pred_region
      %s13 = ssub.s32 4096, 4096
      %14 = vsyncadd [#allocation3], %s13
      %s15 = sshll.u32 [#allocation2], 4
      %s16 = int_to_ptr.vmem [resolvable:$true] %s15
      %21 = dma.hbm_to_vmem [thread:$0]  %s0, 4096, %s16, [#allocation3], 256, 256, 16
    $region5: #{tpu_custom_call.1} parent=1 // pred_fallthru
      _
    // Predicated region
    $region6: #{tpu_custom_call.1} parent=1 // pred_check
      _
    $region7: #{tpu_custom_call.1} parent=1 // pred_check_branch
      %23 = sbr.rel (0) target = $region9
    $region8: #{tpu_custom_call.1} parent=1 // pred_region
      %s25 = ssub.s32 128, 128
      %26 = vsyncadd [#allocation6], %s25
      %s28 = sshll.u32 [#allocation5], 4
      %s29 = int_to_ptr.vmem [resolvable:$true] %s28
      %31 = dma.hbm_to_vmem [thread:$0]  %s1, 128, %s29, [#allocation6]
    $region9: #{tpu_custom_call.1} parent=1 // pred_fallthru
      _
    // Predicated region
    $region10: #{tpu_custom_call.1} parent=1 // pred_check
      _
    $region11: #{tpu_custom_call.1} parent=1 // pred_check_branch
      %33 = sbr.rel (0) target = $region13
    $region12: #{tpu_custom_call.1} parent=1 // pred_region
      %34 = dma.done [#allocation3], 4096
    $region13: #{tpu_custom_call.1} parent=1 // pred_fallthru
      _
    // Predicated region
    $region14: #{tpu_custom_call.1} parent=1 // pred_check
      _
    $region15: #{tpu_custom_call.1} parent=1 // pred_check_branch
      %36 = sbr.rel (0) target = $region17
    $region16: #{tpu_custom_call.1} parent=1 // pred_region
      %37 = dma.done [#allocation6], 128
    $region17: #{tpu_custom_call.1} parent=1 // pred_fallthru
      _
    %v38 = vld [vmem:[#allocation2] sm:$0xff]
    %v39 = vld [vmem:[#allocation2 + $0x8] sm:$0xff]
    %v40 = vld [vmem:[#allocation2 + $0x10] sm:$0xff]
    %v41 = vld [vmem:[#allocation2 + $0x18] sm:$0xff]
    %v42 = vld [vmem:[#allocation2 + $0x20] sm:$0xff]
    %v43 = vld [vmem:[#allocation2 + $0x28] sm:$0xff]
    %v44 = vld [vmem:[#allocation2 + $0x30] sm:$0xff]
    %v45 = vld [vmem:[#allocation2 + $0x38] sm:$0xff]
    %v46 = vld [vmem:[#allocation2 + $0x40] sm:$0xff]
    %v47 = vld [vmem:[#allocation2 + $0x48] sm:$0xff]
    %v48 = vld [vmem:[#allocation2 + $0x50] sm:$0xff]
    %v49 = vld [vmem:[#allocation2 + $0x58] sm:$0xff]
    %v50 = vld [vmem:[#allocation2 + $0x60] sm:$0xff]
    %v51 = vld [vmem:[#allocation2 + $0x68] sm:$0xff]
    %v52 = vld [vmem:[#allocation2 + $0x70] sm:$0xff]
    %v53 = vld [vmem:[#allocation2 + $0x78] sm:$0xff]
    %v54 = vld [vmem:[#allocation2 + $0x80] sm:$0xff]
    %v55 = vld [vmem:[#allocation2 + $0x88] sm:$0xff]
    %v56 = vld [vmem:[#allocation2 + $0x90] sm:$0xff]
    %v57 = vld [vmem:[#allocation2 + $0x98] sm:$0xff]
    %v58 = vld [vmem:[#allocation2 + $0xa0] sm:$0xff]
    %v59 = vld [vmem:[#allocation2 + $0xa8] sm:$0xff]
    %v60 = vld [vmem:[#allocation2 + $0xb0] sm:$0xff]
    %v61 = vld [vmem:[#allocation2 + $0xb8] sm:$0xff]
    %v62 = vld [vmem:[#allocation2 + $0xc0] sm:$0xff]
    %v63 = vld [vmem:[#allocation2 + $0xc8] sm:$0xff]
    %v64 = vld [vmem:[#allocation2 + $0xd0] sm:$0xff]
    %v65 = vld [vmem:[#allocation2 + $0xd8] sm:$0xff]
    %v66 = vld [vmem:[#allocation2 + $0xe0] sm:$0xff]
    %v67 = vld [vmem:[#allocation2 + $0xe8] sm:$0xff]
    %v68 = vld [vmem:[#allocation2 + $0xf0] sm:$0xff]
    %v69 = vld [vmem:[#allocation2 + $0xf8] sm:$0xff]
    %v70 = vld [vmem:[#allocation5] sm:$0xff]
    %v71 = vunpack.c.0.f8e4m3fn %v38
    %v72 = vunpack.c.0.f8e4m3fn %v39
    %v73 = vunpack.c.1.f8e4m3fn %v38
    %v74 = vunpack.c.1.f8e4m3fn %v39
    %v75 = vunpack.c.2.f8e4m3fn %v38
    %v76 = vunpack.c.2.f8e4m3fn %v39
    %v77 = vunpack.c.3.f8e4m3fn %v38
    %v78 = vunpack.c.3.f8e4m3fn %v39
    %v79 = vunpack.c.0.f8e4m3fn %v40
    %v80 = vunpack.c.0.f8e4m3fn %v41
    %v81 = vunpack.c.1.f8e4m3fn %v40
    %v82 = vunpack.c.1.f8e4m3fn %v41
    %v83 = vunpack.c.2.f8e4m3fn %v40
    %v84 = vunpack.c.2.f8e4m3fn %v41
    %v85 = vunpack.c.3.f8e4m3fn %v40
    %v86 = vunpack.c.3.f8e4m3fn %v41
    %v87 = vunpack.c.0.f8e4m3fn %v42
    %v88 = vunpack.c.0.f8e4m3fn %v43
    %v89 = vunpack.c.1.f8e4m3fn %v42
    %v90 = vunpack.c.1.f8e4m3fn %v43
    %v91 = vunpack.c.2.f8e4m3fn %v42
    %v92 = vunpack.c.2.f8e4m3fn %v43
    %v93 = vunpack.c.3.f8e4m3fn %v42
    %v94 = vunpack.c.3.f8e4m3fn %v43
    %v95 = vunpack.c.0.f8e4m3fn %v44
    %v96 = vunpack.c.0.f8e4m3fn %v45
    %v97 = vunpack.c.1.f8e4m3fn %v44
    %v98 = vunpack.c.1.f8e4m3fn %v45
    %v99 = vunpack.c.2.f8e4m3fn %v44
    %v100 = vunpack.c.2.f8e4m3fn %v45
    %v101 = vunpack.c.3.f8e4m3fn %v44
    %v102 = vunpack.c.3.f8e4m3fn %v45
    %v103 = vunpack.c.0.f8e4m3fn %v46
    %v104 = vunpack.c.0.f8e4m3fn %v47
    %v105 = vunpack.c.1.f8e4m3fn %v46
    %v106 = vunpack.c.1.f8e4m3fn %v47
    %v107 = vunpack.c.2.f8e4m3fn %v46
    %v108 = vunpack.c.2.f8e4m3fn %v47
    %v109 = vunpack.c.3.f8e4m3fn %v46
    %v110 = vunpack.c.3.f8e4m3fn %v47
    %v111 = vunpack.c.0.f8e4m3fn %v48
    %v112 = vunpack.c.0.f8e4m3fn %v49
    %v113 = vunpack.c.1.f8e4m3fn %v48
    %v114 = vunpack.c.1.f8e4m3fn %v49
    %v115 = vunpack.c.2.f8e4m3fn %v48
    %v116 = vunpack.c.2.f8e4m3fn %v49
    %v117 = vunpack.c.3.f8e4m3fn %v48
    %v118 = vunpack.c.3.f8e4m3fn %v49
    %v119 = vunpack.c.0.f8e4m3fn %v50
    %v120 = vunpack.c.0.f8e4m3fn %v51
    %v121 = vunpack.c.1.f8e4m3fn %v50
    %v122 = vunpack.c.1.f8e4m3fn %v51
    %v123 = vunpack.c.2.f8e4m3fn %v50
    %v124 = vunpack.c.2.f8e4m3fn %v51
    %v125 = vunpack.c.3.f8e4m3fn %v50
    %v126 = vunpack.c.3.f8e4m3fn %v51
    %v127 = vunpack.c.0.f8e4m3fn %v52
    %v128 = vunpack.c.0.f8e4m3fn %v53
    %v129 = vunpack.c.1.f8e4m3fn %v52
    %v130 = vunpack.c.1.f8e4m3fn %v53
    %v131 = vunpack.c.2.f8e4m3fn %v52
    %v132 = vunpack.c.2.f8e4m3fn %v53
    %v133 = vunpack.c.3.f8e4m3fn %v52
    %v134 = vunpack.c.3.f8e4m3fn %v53
    %v135 = vunpack.c.0.f8e4m3fn %v54
    %v136 = vunpack.c.0.f8e4m3fn %v55
    %v137 = vunpack.c.1.f8e4m3fn %v54
    %v138 = vunpack.c.1.f8e4m3fn %v55
    %v139 = vunpack.c.2.f8e4m3fn %v54
    %v140 = vunpack.c.2.f8e4m3fn %v55
    %v141 = vunpack.c.3.f8e4m3fn %v54
    %v142 = vunpack.c.3.f8e4m3fn %v55
    %v143 = vunpack.c.0.f8e4m3fn %v56
    %v144 = vunpack.c.0.f8e4m3fn %v57
    %v145 = vunpack.c.1.f8e4m3fn %v56
    %v146 = vunpack.c.1.f8e4m3fn %v57
    %v147 = vunpack.c.2.f8e4m3fn %v56
    %v148 = vunpack.c.2.f8e4m3fn %v57
    %v149 = vunpack.c.3.f8e4m3fn %v56
    %v150 = vunpack.c.3.f8e4m3fn %v57
    %v151 = vunpack.c.0.f8e4m3fn %v58
    %v152 = vunpack.c.0.f8e4m3fn %v59
    %v153 = vunpack.c.1.f8e4m3fn %v58
    %v154 = vunpack.c.1.f8e4m3fn %v59
    %v155 = vunpack.c.2.f8e4m3fn %v58
    %v156 = vunpack.c.2.f8e4m3fn %v59
    %v157 = vunpack.c.3.f8e4m3fn %v58
    %v158 = vunpack.c.3.f8e4m3fn %v59
    %v159 = vunpack.c.0.f8e4m3fn %v60
    %v160 = vunpack.c.0.f8e4m3fn %v61
    %v161 = vunpack.c.1.f8e4m3fn %v60
    %v162 = vunpack.c.1.f8e4m3fn %v61
    %v163 = vunpack.c.2.f8e4m3fn %v60
    %v164 = vunpack.c.2.f8e4m3fn %v61
    %v165 = vunpack.c.3.f8e4m3fn %v60
    %v166 = vunpack.c.3.f8e4m3fn %v61
    %v167 = vunpack.c.0.f8e4m3fn %v62
    %v168 = vunpack.c.0.f8e4m3fn %v63
    %v169 = vunpack.c.1.f8e4m3fn %v62
    %v170 = vunpack.c.1.f8e4m3fn %v63
    %v171 = vunpack.c.2.f8e4m3fn %v62
    %v172 = vunpack.c.2.f8e4m3fn %v63
    %v173 = vunpack.c.3.f8e4m3fn %v62
    %v174 = vunpack.c.3.f8e4m3fn %v63
    %v175 = vunpack.c.0.f8e4m3fn %v64
    %v176 = vunpack.c.0.f8e4m3fn %v65
    %v177 = vunpack.c.1.f8e4m3fn %v64
    %v178 = vunpack.c.1.f8e4m3fn %v65
    %v179 = vunpack.c.2.f8e4m3fn %v64
    %v180 = vunpack.c.2.f8e4m3fn %v65
    %v181 = vunpack.c.3.f8e4m3fn %v64
    %v182 = vunpack.c.3.f8e4m3fn %v65
    %v183 = vunpack.c.0.f8e4m3fn %v66
    %v184 = vunpack.c.0.f8e4m3fn %v67
    %v185 = vunpack.c.1.f8e4m3fn %v66
    %v186 = vunpack.c.1.f8e4m3fn %v67
    %v187 = vunpack.c.2.f8e4m3fn %v66
    %v188 = vunpack.c.2.f8e4m3fn %v67
    %v189 = vunpack.c.3.f8e4m3fn %v66
    %v190 = vunpack.c.3.f8e4m3fn %v67
    %v191 = vunpack.c.0.f8e4m3fn %v68
    %v192 = vunpack.c.0.f8e4m3fn %v69
    %v193 = vunpack.c.1.f8e4m3fn %v68
    %v194 = vunpack.c.1.f8e4m3fn %v69
    %v195 = vunpack.c.2.f8e4m3fn %v68
    %v196 = vunpack.c.2.f8e4m3fn %v69
    %v197 = vunpack.c.3.f8e4m3fn %v68
    %v198 = vunpack.c.3.f8e4m3fn %v69
    %v201 = vunpack.c.l.s4 1966171168
    %v202 = vunpack.c.0.s8 %v201
    %v203 = vlaneseq
    %v204 = vshrl.u32 %v203, 7
    %v205 = vsub.s32 %v202, %v204
    %v206 = vrot.slane %v70, %v205
    %v207 = vcombine.high %v206, %v206
    %v209 = vunpack.c.l.s4 1966171168
    %v210 = vunpack.c.0.s8 %v209
    %v211 = vlaneseq
    %v212 = vshrl.u32 %v211, 7
    %v213 = vsub.s32 %v210, %v212
    %v214 = vrot.slane %v206, %v213
    %v216 = vunpack.c.l.s4 1966171168
    %v217 = vunpack.c.0.s8 %v216
    %v218 = vlaneseq
    %v219 = vshrl.u32 %v218, 7
    %v220 = vsub.s32 %v217, %v219
    %v221 = vrot.slane %v207, %v220
    %v222 = vcombine.high %v214, %v214
    %v223 = vcombine.high %v221, %v221
    %v224 = vlaneseq
    %v225 = vshrl.u32 %v224, 7
    %v226 = vsub.s32 0, %v225
    %v227 = vrot.slane %v214, %v226
    %v228 = vlaneseq
    %v229 = vshrl.u32 %v228, 7
    %v230 = vsub.s32 1, %v229
    %v231 = vrot.slane %v214, %v230
    %v232 = vlaneseq
    %v233 = vshrl.u32 %v232, 7
    %v234 = vsub.s32 0, %v233
    %v235 = vrot.slane %v221, %v234
    %v236 = vlaneseq
    %v237 = vshrl.u32 %v236, 7
    %v238 = vsub.s32 1, %v237
    %v239 = vrot.slane %v221, %v238
    %v240 = vlaneseq
    %v241 = vshrl.u32 %v240, 7
    %v242 = vsub.s32 0, %v241
    %v243 = vrot.slane %v222, %v242
    %v244 = vlaneseq
    %v245 = vshrl.u32 %v244, 7
    %v246 = vsub.s32 1, %v245
    %v247 = vrot.slane %v222, %v246
    %v248 = vlaneseq
    %v249 = vshrl.u32 %v248, 7
    %v250 = vsub.s32 0, %v249
    %v251 = vrot.slane %v223, %v250
    %v252 = vlaneseq
    %v253 = vshrl.u32 %v252, 7
    %v254 = vsub.s32 1, %v253
    %v255 = vrot.slane %v223, %v254
    %v264 = vmul.f32 %v71, %v227
    %v265 = vmul.f32 %v72, %v231
    %v266 = vmul.f32 %v73, %v227
    %v267 = vmul.f32 %v74, %v231
    %v268 = vmul.f32 %v75, %v227
    %v269 = vmul.f32 %v76, %v231
    %v270 = vmul.f32 %v77, %v227
    %v271 = vmul.f32 %v78, %v231
    %v272 = vmul.f32 %v79, %v227
    %v273 = vmul.f32 %v80, %v231
    %v274 = vmul.f32 %v81, %v227
    %v275 = vmul.f32 %v82, %v231
    %v276 = vmul.f32 %v83, %v227
    %v277 = vmul.f32 %v84, %v231
    %v278 = vmul.f32 %v85, %v227
    %v279 = vmul.f32 %v86, %v231
    %v280 = vmul.f32 %v87, %v227
    %v281 = vmul.f32 %v88, %v231
    %v282 = vmul.f32 %v89, %v227
    %v283 = vmul.f32 %v90, %v231
    %v284 = vmul.f32 %v91, %v227
    %v285 = vmul.f32 %v92, %v231
    %v286 = vmul.f32 %v93, %v227
    %v287 = vmul.f32 %v94, %v231
    %v288 = vmul.f32 %v95, %v227
    %v289 = vmul.f32 %v96, %v231
    %v290 = vmul.f32 %v97, %v227
    %v291 = vmul.f32 %v98, %v231
    %v292 = vmul.f32 %v99, %v227
    %v293 = vmul.f32 %v100, %v231
    %v294 = vmul.f32 %v101, %v227
    %v295 = vmul.f32 %v102, %v231
    %v296 = vmul.f32 %v103, %v235
    %v297 = vmul.f32 %v104, %v239
    %v298 = vmul.f32 %v105, %v235
    %v299 = vmul.f32 %v106, %v239
    %v300 = vmul.f32 %v107, %v235
    %v301 = vmul.f32 %v108, %v239
    %v302 = vmul.f32 %v109, %v235
    %v303 = vmul.f32 %v110, %v239
    %v304 = vmul.f32 %v111, %v235
    %v305 = vmul.f32 %v112, %v239
    %v306 = vmul.f32 %v113, %v235
    %v307 = vmul.f32 %v114, %v239
    %v308 = vmul.f32 %v115, %v235
    %v309 = vmul.f32 %v116, %v239
    %v310 = vmul.f32 %v117, %v235
    %v311 = vmul.f32 %v118, %v239
    %v312 = vmul.f32 %v119, %v235
    %v313 = vmul.f32 %v120, %v239
    %v314 = vmul.f32 %v121, %v235
    %v315 = vmul.f32 %v122, %v239
    %v316 = vmul.f32 %v123, %v235
    %v317 = vmul.f32 %v124, %v239
    %v318 = vmul.f32 %v125, %v235
    %v319 = vmul.f32 %v126, %v239
    %v320 = vmul.f32 %v127, %v235
    %v321 = vmul.f32 %v128, %v239
    %v322 = vmul.f32 %v129, %v235
    %v323 = vmul.f32 %v130, %v239
    %v324 = vmul.f32 %v131, %v235
    %v325 = vmul.f32 %v132, %v239
    %v326 = vmul.f32 %v133, %v235
    %v327 = vmul.f32 %v134, %v239
    %v328 = vmul.f32 %v135, %v243
    %v329 = vmul.f32 %v136, %v247
    %v330 = vmul.f32 %v137, %v243
    %v331 = vmul.f32 %v138, %v247
    %v332 = vmul.f32 %v139, %v243
    %v333 = vmul.f32 %v140, %v247
    %v334 = vmul.f32 %v141, %v243
    %v335 = vmul.f32 %v142, %v247
    %v336 = vmul.f32 %v143, %v243
    %v337 = vmul.f32 %v144, %v247
    %v338 = vmul.f32 %v145, %v243
    %v339 = vmul.f32 %v146, %v247
    %v340 = vmul.f32 %v147, %v243
    %v341 = vmul.f32 %v148, %v247
    %v342 = vmul.f32 %v149, %v243
    %v343 = vmul.f32 %v150, %v247
    %v344 = vmul.f32 %v151, %v243
    %v345 = vmul.f32 %v152, %v247
    %v346 = vmul.f32 %v153, %v243
    %v347 = vmul.f32 %v154, %v247
    %v348 = vmul.f32 %v155, %v243
    %v349 = vmul.f32 %v156, %v247
    %v350 = vmul.f32 %v157, %v243
    %v351 = vmul.f32 %v158, %v247
    %v352 = vmul.f32 %v159, %v243
    %v353 = vmul.f32 %v160, %v247
    %v354 = vmul.f32 %v161, %v243
    %v355 = vmul.f32 %v162, %v247
    %v356 = vmul.f32 %v163, %v243
    %v357 = vmul.f32 %v164, %v247
    %v358 = vmul.f32 %v165, %v243
    %v359 = vmul.f32 %v166, %v247
    %v360 = vmul.f32 %v167, %v251
    %v361 = vmul.f32 %v168, %v255
    %v362 = vmul.f32 %v169, %v251
    %v363 = vmul.f32 %v170, %v255
    %v364 = vmul.f32 %v171, %v251
    %v365 = vmul.f32 %v172, %v255
    %v366 = vmul.f32 %v173, %v251
    %v367 = vmul.f32 %v174, %v255
    %v368 = vmul.f32 %v175, %v251
    %v369 = vmul.f32 %v176, %v255
    %v370 = vmul.f32 %v177, %v251
    %v371 = vmul.f32 %v178, %v255
    %v372 = vmul.f32 %v179, %v251
    %v373 = vmul.f32 %v180, %v255
    %v374 = vmul.f32 %v181, %v251
    %v375 = vmul.f32 %v182, %v255
    %v376 = vmul.f32 %v183, %v251
    %v377 = vmul.f32 %v184, %v255
    %v378 = vmul.f32 %v185, %v251
    %v379 = vmul.f32 %v186, %v255
    %v380 = vmul.f32 %v187, %v251
    %v381 = vmul.f32 %v188, %v255
    %v382 = vmul.f32 %v189, %v251
    %v383 = vmul.f32 %v190, %v255
    %v384 = vmul.f32 %v191, %v251
    %v385 = vmul.f32 %v192, %v255
    %v386 = vmul.f32 %v193, %v251
    %v387 = vmul.f32 %v194, %v255
    %v388 = vmul.f32 %v195, %v251
    %v389 = vmul.f32 %v196, %v255
    %v390 = vmul.f32 %v197, %v251
    %v391 = vmul.f32 %v198, %v255
    %v392 = vpack.c.bf16 %v266, %v264
    %v393 = vpack.c.bf16 %v267, %v265
    %v394 = vpack.c.bf16 %v270, %v268
    %v395 = vpack.c.bf16 %v271, %v269
    %v396 = vpack.c.bf16 %v274, %v272
    %v397 = vpack.c.bf16 %v275, %v273
    %v398 = vpack.c.bf16 %v278, %v276
    %v399 = vpack.c.bf16 %v279, %v277
    %v400 = vpack.c.bf16 %v282, %v280
    %v401 = vpack.c.bf16 %v283, %v281
    %v402 = vpack.c.bf16 %v286, %v284
    %v403 = vpack.c.bf16 %v287, %v285
    %v404 = vpack.c.bf16 %v290, %v288
    %v405 = vpack.c.bf16 %v291, %v289
    %v406 = vpack.c.bf16 %v294, %v292
    %v407 = vpack.c.bf16 %v295, %v293
    %v408 = vpack.c.bf16 %v298, %v296
    %v409 = vpack.c.bf16 %v299, %v297
    %v410 = vpack.c.bf16 %v302, %v300
    %v411 = vpack.c.bf16 %v303, %v301
    %v412 = vpack.c.bf16 %v306, %v304
    %v413 = vpack.c.bf16 %v307, %v305
    %v414 = vpack.c.bf16 %v310, %v308
    %v415 = vpack.c.bf16 %v311, %v309
    %v416 = vpack.c.bf16 %v314, %v312
    %v417 = vpack.c.bf16 %v315, %v313
    %v418 = vpack.c.bf16 %v318, %v316
    %v419 = vpack.c.bf16 %v319, %v317
    %v420 = vpack.c.bf16 %v322, %v320
    %v421 = vpack.c.bf16 %v323, %v321
    %v422 = vpack.c.bf16 %v326, %v324
    %v423 = vpack.c.bf16 %v327, %v325
    %v424 = vpack.c.bf16 %v330, %v328
    %v425 = vpack.c.bf16 %v331, %v329
    %v426 = vpack.c.bf16 %v334, %v332
    %v427 = vpack.c.bf16 %v335, %v333
    %v428 = vpack.c.bf16 %v338, %v336
    %v429 = vpack.c.bf16 %v339, %v337
    %v430 = vpack.c.bf16 %v342, %v340
    %v431 = vpack.c.bf16 %v343, %v341
    %v432 = vpack.c.bf16 %v346, %v344
    %v433 = vpack.c.bf16 %v347, %v345
    %v434 = vpack.c.bf16 %v350, %v348
    %v435 = vpack.c.bf16 %v351, %v349
    %v436 = vpack.c.bf16 %v354, %v352
    %v437 = vpack.c.bf16 %v355, %v353
    %v438 = vpack.c.bf16 %v358, %v356
    %v439 = vpack.c.bf16 %v359, %v357
    %v440 = vpack.c.bf16 %v362, %v360
    %v441 = vpack.c.bf16 %v363, %v361
    %v442 = vpack.c.bf16 %v366, %v364
    %v443 = vpack.c.bf16 %v367, %v365
    %v444 = vpack.c.bf16 %v370, %v368
    %v445 = vpack.c.bf16 %v371, %v369
    %v446 = vpack.c.bf16 %v374, %v372
    %v447 = vpack.c.bf16 %v375, %v373
    %v448 = vpack.c.bf16 %v378, %v376
    %v449 = vpack.c.bf16 %v379, %v377
    %v450 = vpack.c.bf16 %v382, %v380
    %v451 = vpack.c.bf16 %v383, %v381
    %v452 = vpack.c.bf16 %v386, %v384
    %v453 = vpack.c.bf16 %v387, %v385
    %v454 = vpack.c.bf16 %v390, %v388
    %v455 = vpack.c.bf16 %v391, %v389
    %v520 = vunpack.c.l.b16 %v392
    %v521 = vunpack.c.l.b16 %v393
    %v522 = vunpack.c.h.b16 %v392
    %v523 = vunpack.c.h.b16 %v393
    %v524 = vunpack.c.l.b16 %v394
    %v525 = vunpack.c.l.b16 %v395
    %v526 = vunpack.c.h.b16 %v394
    %v527 = vunpack.c.h.b16 %v395
    %v528 = vunpack.c.l.b16 %v396
    %v529 = vunpack.c.l.b16 %v397
    %v530 = vunpack.c.h.b16 %v396
    %v531 = vunpack.c.h.b16 %v397
    %v532 = vunpack.c.l.b16 %v398
    %v533 = vunpack.c.l.b16 %v399
    %v534 = vunpack.c.h.b16 %v398
    %v535 = vunpack.c.h.b16 %v399
    %v536 = vunpack.c.l.b16 %v400
    %v537 = vunpack.c.l.b16 %v401
    %v538 = vunpack.c.h.b16 %v400
    %v539 = vunpack.c.h.b16 %v401
    %v540 = vunpack.c.l.b16 %v402
    %v541 = vunpack.c.l.b16 %v403
    %v542 = vunpack.c.h.b16 %v402
    %v543 = vunpack.c.h.b16 %v403
    %v544 = vunpack.c.l.b16 %v404
    %v545 = vunpack.c.l.b16 %v405
    %v546 = vunpack.c.h.b16 %v404
    %v547 = vunpack.c.h.b16 %v405
    %v548 = vunpack.c.l.b16 %v406
    %v549 = vunpack.c.l.b16 %v407
    %v550 = vunpack.c.h.b16 %v406
    %v551 = vunpack.c.h.b16 %v407
    %v552 = vunpack.c.l.b16 %v408
    %v553 = vunpack.c.l.b16 %v409
    %v554 = vunpack.c.h.b16 %v408
    %v555 = vunpack.c.h.b16 %v409
    %v556 = vunpack.c.l.b16 %v410
    %v557 = vunpack.c.l.b16 %v411
    %v558 = vunpack.c.h.b16 %v410
    %v559 = vunpack.c.h.b16 %v411
    %v560 = vunpack.c.l.b16 %v412
    %v561 = vunpack.c.l.b16 %v413
    %v562 = vunpack.c.h.b16 %v412
    %v563 = vunpack.c.h.b16 %v413
    %v564 = vunpack.c.l.b16 %v414
    %v565 = vunpack.c.l.b16 %v415
    %v566 = vunpack.c.h.b16 %v414
    %v567 = vunpack.c.h.b16 %v415
    %v568 = vunpack.c.l.b16 %v416
    %v569 = vunpack.c.l.b16 %v417
    %v570 = vunpack.c.h.b16 %v416
    %v571 = vunpack.c.h.b16 %v417
    %v572 = vunpack.c.l.b16 %v418
    %v573 = vunpack.c.l.b16 %v419
    %v574 = vunpack.c.h.b16 %v418
    %v575 = vunpack.c.h.b16 %v419
    %v576 = vunpack.c.l.b16 %v420
    %v577 = vunpack.c.l.b16 %v421
    %v578 = vunpack.c.h.b16 %v420
    %v579 = vunpack.c.h.b16 %v421
    %v580 = vunpack.c.l.b16 %v422
    %v581 = vunpack.c.l.b16 %v423
    %v582 = vunpack.c.h.b16 %v422
    %v583 = vunpack.c.h.b16 %v423
    %v584 = vunpack.c.l.b16 %v424
    %v585 = vunpack.c.l.b16 %v425
    %v586 = vunpack.c.h.b16 %v424
    %v587 = vunpack.c.h.b16 %v425
    %v588 = vunpack.c.l.b16 %v426
    %v589 = vunpack.c.l.b16 %v427
    %v590 = vunpack.c.h.b16 %v426
    %v591 = vunpack.c.h.b16 %v427
    %v592 = vunpack.c.l.b16 %v428
    %v593 = vunpack.c.l.b16 %v429
    %v594 = vunpack.c.h.b16 %v428
    %v595 = vunpack.c.h.b16 %v429
    %v596 = vunpack.c.l.b16 %v430
    %v597 = vunpack.c.l.b16 %v431
    %v598 = vunpack.c.h.b16 %v430
    %v599 = vunpack.c.h.b16 %v431
    %v600 = vunpack.c.l.b16 %v432
    %v601 = vunpack.c.l.b16 %v433
    %v602 = vunpack.c.h.b16 %v432
    %v603 = vunpack.c.h.b16 %v433
    %v604 = vunpack.c.l.b16 %v434
    %v605 = vunpack.c.l.b16 %v435
    %v606 = vunpack.c.h.b16 %v434
    %v607 = vunpack.c.h.b16 %v435
    %v608 = vunpack.c.l.b16 %v436
    %v609 = vunpack.c.l.b16 %v437
    %v610 = vunpack.c.h.b16 %v436
    %v611 = vunpack.c.h.b16 %v437
    %v612 = vunpack.c.l.b16 %v438
    %v613 = vunpack.c.l.b16 %v439
    %v614 = vunpack.c.h.b16 %v438
    %v615 = vunpack.c.h.b16 %v439
    %v616 = vunpack.c.l.b16 %v440
    %v617 = vunpack.c.l.b16 %v441
    %v618 = vunpack.c.h.b16 %v440
    %v619 = vunpack.c.h.b16 %v441
    %v620 = vunpack.c.l.b16 %v442
    %v621 = vunpack.c.l.b16 %v443
    %v622 = vunpack.c.h.b16 %v442
    %v623 = vunpack.c.h.b16 %v443
    %v624 = vunpack.c.l.b16 %v444
    %v625 = vunpack.c.l.b16 %v445
    %v626 = vunpack.c.h.b16 %v444
    %v627 = vunpack.c.h.b16 %v445
    %v628 = vunpack.c.l.b16 %v446
    %v629 = vunpack.c.l.b16 %v447
    %v630 = vunpack.c.h.b16 %v446
    %v631 = vunpack.c.h.b16 %v447
    %v632 = vunpack.c.l.b16 %v448
    %v633 = vunpack.c.l.b16 %v449
    %v634 = vunpack.c.h.b16 %v448
    %v635 = vunpack.c.h.b16 %v449
    %v636 = vunpack.c.l.b16 %v450
    %v637 = vunpack.c.l.b16 %v451
    %v638 = vunpack.c.h.b16 %v450
    %v639 = vunpack.c.h.b16 %v451
    %v640 = vunpack.c.l.b16 %v452
    %v641 = vunpack.c.l.b16 %v453
    %v642 = vunpack.c.h.b16 %v452
    %v643 = vunpack.c.h.b16 %v453
    %v644 = vunpack.c.l.b16 %v454
    %v645 = vunpack.c.l.b16 %v455
    %v646 = vunpack.c.h.b16 %v454
    %v647 = vunpack.c.h.b16 %v455
    %v648 = vpack.c.b16 %v521, %v520
    %v649 = vpack.c.b16 %v523, %v522
    %v650 = vpack.c.b16 %v525, %v524
    %v651 = vpack.c.b16 %v527, %v526
    %v652 = vpack.c.b16 %v529, %v528
    %v653 = vpack.c.b16 %v531, %v530
    %v654 = vpack.c.b16 %v533, %v532
    %v655 = vpack.c.b16 %v535, %v534
    %v656 = vpack.c.b16 %v537, %v536
    %v657 = vpack.c.b16 %v539, %v538
    %v658 = vpack.c.b16 %v541, %v540
    %v659 = vpack.c.b16 %v543, %v542
    %v660 = vpack.c.b16 %v545, %v544
    %v661 = vpack.c.b16 %v547, %v546
    %v662 = vpack.c.b16 %v549, %v548
    %v663 = vpack.c.b16 %v551, %v550
    %v664 = vpack.c.b16 %v553, %v552
    %v665 = vpack.c.b16 %v555, %v554
    %v666 = vpack.c.b16 %v557, %v556
    %v667 = vpack.c.b16 %v559, %v558
    %v668 = vpack.c.b16 %v561, %v560
    %v669 = vpack.c.b16 %v563, %v562
    %v670 = vpack.c.b16 %v565, %v564
    %v671 = vpack.c.b16 %v567, %v566
    %v672 = vpack.c.b16 %v569, %v568
    %v673 = vpack.c.b16 %v571, %v570
    %v674 = vpack.c.b16 %v573, %v572
    %v675 = vpack.c.b16 %v575, %v574
    %v676 = vpack.c.b16 %v577, %v576
    %v677 = vpack.c.b16 %v579, %v578
    %v678 = vpack.c.b16 %v581, %v580
    %v679 = vpack.c.b16 %v583, %v582
    %v680 = vpack.c.b16 %v585, %v584
    %v681 = vpack.c.b16 %v587, %v586
    %v682 = vpack.c.b16 %v589, %v588
    %v683 = vpack.c.b16 %v591, %v590
    %v684 = vpack.c.b16 %v593, %v592
    %v685 = vpack.c.b16 %v595, %v594
    %v686 = vpack.c.b16 %v597, %v596
    %v687 = vpack.c.b16 %v599, %v598
    %v688 = vpack.c.b16 %v601, %v600
    %v689 = vpack.c.b16 %v603, %v602
    %v690 = vpack.c.b16 %v605, %v604
    %v691 = vpack.c.b16 %v607, %v606
    %v692 = vpack.c.b16 %v609, %v608
    %v693 = vpack.c.b16 %v611, %v610
    %v694 = vpack.c.b16 %v613, %v612
    %v695 = vpack.c.b16 %v615, %v614
    %v696 = vpack.c.b16 %v617, %v616
    %v697 = vpack.c.b16 %v619, %v618
    %v698 = vpack.c.b16 %v621, %v620
    %v699 = vpack.c.b16 %v623, %v622
    %v700 = vpack.c.b16 %v625, %v624
    %v701 = vpack.c.b16 %v627, %v626
    %v702 = vpack.c.b16 %v629, %v628
    %v703 = vpack.c.b16 %v631, %v630
    %v704 = vpack.c.b16 %v633, %v632
    %v705 = vpack.c.b16 %v635, %v634
    %v706 = vpack.c.b16 %v637, %v636
    %v707 = vpack.c.b16 %v639, %v638
    %v708 = vpack.c.b16 %v641, %v640
    %v709 = vpack.c.b16 %v643, %v642
    %v710 = vpack.c.b16 %v645, %v644
    %v711 = vpack.c.b16 %v647, %v646
    %776 = vst [vmem:[#allocation7] sm:$0xff] %v648
    %777 = vst [vmem:[#allocation7 + $0x8] sm:$0xff] %v649
    %778 = vst [vmem:[#allocation7 + $0x10] sm:$0xff] %v650
    %779 = vst [vmem:[#allocation7 + $0x18] sm:$0xff] %v651
    %780 = vst [vmem:[#allocation7 + $0x20] sm:$0xff] %v652
    %781 = vst [vmem:[#allocation7 + $0x28] sm:$0xff] %v653
    %782 = vst [vmem:[#allocation7 + $0x30] sm:$0xff] %v654
    %783 = vst [vmem:[#allocation7 + $0x38] sm:$0xff] %v655
    %784 = vst [vmem:[#allocation7 + $0x40] sm:$0xff] %v656
    %785 = vst [vmem:[#allocation7 + $0x48] sm:$0xff] %v657
    %786 = vst [vmem:[#allocation7 + $0x50] sm:$0xff] %v658
    %787 = vst [vmem:[#allocation7 + $0x58] sm:$0xff] %v659
    %788 = vst [vmem:[#allocation7 + $0x60] sm:$0xff] %v660
    %789 = vst [vmem:[#allocation7 + $0x68] sm:$0xff] %v661
    %790 = vst [vmem:[#allocation7 + $0x70] sm:$0xff] %v662
    %791 = vst [vmem:[#allocation7 + $0x78] sm:$0xff] %v663
    %792 = vst [vmem:[#allocation7 + $0x80] sm:$0xff] %v664
    %793 = vst [vmem:[#allocation7 + $0x88] sm:$0xff] %v665
    %794 = vst [vmem:[#allocation7 + $0x90] sm:$0xff] %v666
    %795 = vst [vmem:[#allocation7 + $0x98] sm:$0xff] %v667
    %796 = vst [vmem:[#allocation7 + $0xa0] sm:$0xff] %v668
    %797 = vst [vmem:[#allocation7 + $0xa8] sm:$0xff] %v669
    %798 = vst [vmem:[#allocation7 + $0xb0] sm:$0xff] %v670
    %799 = vst [vmem:[#allocation7 + $0xb8] sm:$0xff] %v671
    %800 = vst [vmem:[#allocation7 + $0xc0] sm:$0xff] %v672
    %801 = vst [vmem:[#allocation7 + $0xc8] sm:$0xff] %v673
    %802 = vst [vmem:[#allocation7 + $0xd0] sm:$0xff] %v674
    %803 = vst [vmem:[#allocation7 + $0xd8] sm:$0xff] %v675
    %804 = vst [vmem:[#allocation7 + $0xe0] sm:$0xff] %v676
    %805 = vst [vmem:[#allocation7 + $0xe8] sm:$0xff] %v677
    %806 = vst [vmem:[#allocation7 + $0xf0] sm:$0xff] %v678
    %807 = vst [vmem:[#allocation7 + $0xf8] sm:$0xff] %v679
    %808 = vst [vmem:[#allocation7 + $0x100] sm:$0xff] %v680
    %809 = vst [vmem:[#allocation7 + $0x108] sm:$0xff] %v681
    %810 = vst [vmem:[#allocation7 + $0x110] sm:$0xff] %v682
    %811 = vst [vmem:[#allocation7 + $0x118] sm:$0xff] %v683
    %812 = vst [vmem:[#allocation7 + $0x120] sm:$0xff] %v684
    %813 = vst [vmem:[#allocation7 + $0x128] sm:$0xff] %v685
    %814 = vst [vmem:[#allocation7 + $0x130] sm:$0xff] %v686
    %815 = vst [vmem:[#allocation7 + $0x138] sm:$0xff] %v687
    %816 = vst [vmem:[#allocation7 + $0x140] sm:$0xff] %v688
    %817 = vst [vmem:[#allocation7 + $0x148] sm:$0xff] %v689
    %818 = vst [vmem:[#allocation7 + $0x150] sm:$0xff] %v690
    %819 = vst [vmem:[#allocation7 + $0x158] sm:$0xff] %v691
    %820 = vst [vmem:[#allocation7 + $0x160] sm:$0xff] %v692
    %821 = vst [vmem:[#allocation7 + $0x168] sm:$0xff] %v693
    %822 = vst [vmem:[#allocation7 + $0x170] sm:$0xff] %v694
    %823 = vst [vmem:[#allocation7 + $0x178] sm:$0xff] %v695
    %824 = vst [vmem:[#allocation7 + $0x180] sm:$0xff] %v696
    %825 = vst [vmem:[#allocation7 + $0x188] sm:$0xff] %v697
    %826 = vst [vmem:[#allocation7 + $0x190] sm:$0xff] %v698
    %827 = vst [vmem:[#allocation7 + $0x198] sm:$0xff] %v699
    %828 = vst [vmem:[#allocation7 + $0x1a0] sm:$0xff] %v700
    %829 = vst [vmem:[#allocation7 + $0x1a8] sm:$0xff] %v701
    %830 = vst [vmem:[#allocation7 + $0x1b0] sm:$0xff] %v702
    %831 = vst [vmem:[#allocation7 + $0x1b8] sm:$0xff] %v703
    %832 = vst [vmem:[#allocation7 + $0x1c0] sm:$0xff] %v704
    %833 = vst [vmem:[#allocation7 + $0x1c8] sm:$0xff] %v705
    %834 = vst [vmem:[#allocation7 + $0x1d0] sm:$0xff] %v706
    %835 = vst [vmem:[#allocation7 + $0x1d8] sm:$0xff] %v707
    %836 = vst [vmem:[#allocation7 + $0x1e0] sm:$0xff] %v708
    %837 = vst [vmem:[#allocation7 + $0x1e8] sm:$0xff] %v709
    %838 = vst [vmem:[#allocation7 + $0x1f0] sm:$0xff] %v710
    %839 = vst [vmem:[#allocation7 + $0x1f8] sm:$0xff] %v711
    // Predicated region
    $region18: #{tpu_custom_call.1} parent=1 // pred_check
      _
    $region19: #{tpu_custom_call.1} parent=1 // pred_check_branch
      %841 = sbr.rel (0) target = $region21
    $region20: #{tpu_custom_call.1} parent=1 // pred_region
      %s843 = ssub.s32 8192, 8192
      %844 = vsyncadd [#allocation4], %s843
      %s845 = sshll.u32 [#allocation7], 4
      %s846 = int_to_ptr.vmem [resolvable:$true] %s845
      %851 = dma.vmem_to_hbm [thread:$0]  %s846, 8192, %s2, [#allocation4], 128, 128, 8
    $region21: #{tpu_custom_call.1} parent=1 // pred_fallthru
      _
    // Predicated region
    $region22: #{tpu_custom_call.1} parent=1 // pred_check
      _
    $region23: #{tpu_custom_call.1} parent=1 // pred_check_branch
      %853 = sbr.rel (0) target = $region25
    $region24: #{tpu_custom_call.1} parent=1 // pred_region
      %854 = dma.done [#allocation4], 8192
    $region25: #{tpu_custom_call.1} parent=1 // pred_fallthru
      _
    %855 = vsyncpa [#allocation3], 1
    %856 = vsyncpa [#allocation6], 1
    %857 = vsyncpa [#allocation4], 1

</llo_original>
